<compile_context>
chip_gen: v6e
topology: v6e:2x2x1
jax: 0.10.0
libtpu: 0.0.40
codegen_flags: <defaults>
</compile_context>

<pallas_src>
import math

import jax
import jax.numpy as jnp
from jax.experimental import pallas as pl
from jax.experimental.pallas import tpu as pltpu


def _round_up(x, m):
    return ((x + m - 1) // m) * m


def _ncf_mlp_kernel(uidx_ref, iidx_ref,
                    uemb_t_ref, iemb_t_ref,
                    w1u_ref, w1i_ref, b1_ref,
                    w2_ref, b2_ref,
                    w3_ref, b3_ref,
                    wo_ref, bo_ref,
                    o_ref):
    """One batch tile: fused embedding gather + full MLP tower, batch on the lane axis."""
    f32 = jnp.float32
    tb = uidx_ref.shape[1]          # lanes = batch tile
    nu = uemb_t_ref.shape[1]        # num_users
    ni = iemb_t_ref.shape[1]        # num_items

    # ---- fused embedding lookup: gather-as-matmul on VMEM-pinned tables ----
    u_oh = jnp.where(
        jax.lax.broadcasted_iota(jnp.int32, (nu, tb), 0) == uidx_ref[...], 1.0, 0.0)
    i_oh = jnp.where(
        jax.lax.broadcasted_iota(jnp.int32, (ni, tb), 0) == iidx_ref[...], 1.0, 0.0)
    u = jnp.dot(uemb_t_ref[...].astype(f32), u_oh, preferred_element_type=f32)   # [D, TB]
    t = jnp.dot(iemb_t_ref[...].astype(f32), i_oh, preferred_element_type=f32)   # [D, TB]

    # ---- fc1 on the implicit concat([u, t]) (W1 is pre-split in the wrapper) ----
    v = (jnp.dot(w1u_ref[...], u, preferred_element_type=f32)
         + jnp.dot(w1i_ref[...], t, preferred_element_type=f32)
         + b1_ref[...])
    v = jnp.maximum(v, 0.0)

    v = jnp.maximum(jnp.dot(w2_ref[...], v, preferred_element_type=f32) + b2_ref[...], 0.0)
    v = jnp.maximum(jnp.dot(w3_ref[...], v, preferred_element_type=f32) + b3_ref[...], 0.0)

    # ---- affine_output (out_features=1): VPU multiply + sublane reduce, lane-dense result
    logits = jnp.sum(v * wo_ref[...], axis=0, keepdims=True) + bo_ref[...]        # [1, TB]
    o_ref[...] = jax.nn.sigmoid(logits).astype(o_ref.dtype)


@jax.jit
def ncf_mlp_forward(user_indices, item_indices, params):
    B = user_indices.shape[0]
    tile_b = min(512, _round_up(max(B, 1), 128))       # lane-aligned batch tile
    n_tiles = pl.cdiv(B, tile_b)
    bp = n_tiles * tile_b
    pad = bp - B

    # Indices are the only per-row HBM input; pad tail tile with a valid index (0).
    uidx = jnp.pad(user_indices.astype(jnp.int32), (0, pad)).reshape(1, bp)
    iidx = jnp.pad(item_indices.astype(jnp.int32), (0, pad)).reshape(1, bp)

    uemb_t = params["embedding_user"].T                 # [D, NU]  (bf16 in HBM)
    iemb_t = params["embedding_item"].T                 # [D, NI]
    D = uemb_t.shape[0]

    w1 = params["fc1_w"]                                # torch layout [out, in]
    w1u, w1i = w1[:, :D], w1[:, D:]
    b1 = params["fc1_b"][:, None]
    w2, b2 = params["fc2_w"], params["fc2_b"][:, None]
    w3, b3 = params["fc3_w"], params["fc3_b"][:, None]
    wo = params["out_w"].reshape(-1, 1)                 # [L3, 1]
    bo = params["out_b"].reshape(1, 1)                  # [1, 1]

    nu, ni = uemb_t.shape[1], iemb_t.shape[1]
    l0, l1, l2, l3 = w1.shape[1], w1.shape[0], w2.shape[0], w3.shape[0]

    # Cost hint: bandwidth-bound on indices in + ratings out (+ one-time constants).
    consts = (uemb_t, iemb_t, w1u, w1i, b1, w2, b2, w3, b3, wo, bo)
    const_bytes = sum(int(a.size) * a.dtype.itemsize for a in consts)
    flops = 2 * bp * (nu * D + ni * D + l0 * l1 + l1 * l2 + l2 * l3 + l3)
    cost = pl.CostEstimate(flops=flops, transcendentals=bp,
                           bytes_accessed=2 * bp * 4 + bp * 4 + const_bytes)

    # VMEM-aware limit (v7x has 64 MiB physical vs 128 MiB on v5e/v6e).
    try:
        vmem_cap = int(pltpu.get_tpu_info().vmem_capacity_bytes)
    except Exception:
        vmem_cap = 64 * 1024 * 1024
    vmem_limit = max(16 * 1024 * 1024, min(vmem_cap // 2, 64 * 1024 * 1024))

    idx_spec = pl.BlockSpec((1, tile_b), lambda i: (0, i))
    const_spec = lambda a: pl.BlockSpec(a.shape, lambda i: (0, 0))  # resident across steps

    out = pl.pallas_call(
        _ncf_mlp_kernel,
        out_shape=jax.ShapeDtypeStruct((n_tiles, tile_b), jnp.float32),
        grid=(n_tiles,),
        in_specs=[idx_spec, idx_spec,
                  const_spec(uemb_t), const_spec(iemb_t),
                  const_spec(w1u), const_spec(w1i), const_spec(b1),
                  const_spec(w2), const_spec(b2),
                  const_spec(w3), const_spec(b3),
                  const_spec(wo), const_spec(bo)],
        out_specs=pl.BlockSpec((1, tile_b), lambda i: (i, 0)),
        compiler_params=pltpu.CompilerParams(
            dimension_semantics=("parallel",),
            vmem_limit_bytes=vmem_limit),
        cost_estimate=cost,
    )(uidx, iidx, uemb_t, iemb_t, w1u, w1i, b1, w2, b2, w3, b3, wo, bo)

    return out.reshape(bp, 1)[:B]                       # [B, 1]


def init_params(key, num_users, num_items, latent_dim, layers):
    """Deterministic synthetic params (torch.nn.Linear layout: W[out,in], b[out])."""
    assert layers[0] == 2 * latent_dim
    keys = jax.random.split(key, 10)
    k = iter(keys)

    def lin(kw, kb, fan_in, fan_out):
        bound = 1.0 / math.sqrt(fan_in)
        w = jax.random.uniform(kw, (fan_out, fan_in), jnp.float32, -bound, bound)
        b = jax.random.uniform(kb, (fan_out,), jnp.float32, -bound, bound)
        return w, b

    params = {
        # HBM-resident embedding tables stored in bf16 (per perf review).
        "embedding_user": jax.random.normal(
            next(k), (num_users, latent_dim), jnp.float32).astype(jnp.bfloat16),
        "embedding_item": jax.random.normal(
            next(k), (num_items, latent_dim), jnp.float32).astype(jnp.bfloat16),
    }
    params["fc1_w"], params["fc1_b"] = lin(next(k), next(k), layers[0], layers[1])
    params["fc2_w"], params["fc2_b"] = lin(next(k), next(k), layers[1], layers[2])
    params["fc3_w"], params["fc3_b"] = lin(next(k), next(k), layers[2], layers[3])
    params["out_w"], params["out_b"] = lin(next(k), next(k), layers[3], 1)
    return params


def reference_forward(user_indices, item_indices, params):
    """Pure-JAX reference matching the PyTorch forward pass."""
    u = jnp.take(params["embedding_user"], user_indices, axis=0).astype(jnp.float32)
    it = jnp.take(params["embedding_item"], item_indices, axis=0).astype(jnp.float32)
    v = jnp.concatenate([u, it], axis=-1)
    for wk, bk in (("fc1_w", "fc1_b"), ("fc2_w", "fc2_b"), ("fc3_w", "fc3_b")):
        v = jnp.maximum(v @ params[wk].T + params[bk], 0.0)
    logits = v @ params["out_w"].T + params["out_b"]
    return jax.nn.sigmoid(logits)


if __name__ == "__main__":
    # Small config consistent with the module: layers[0] == 2 * latent_dim.
    config = dict(num_users=16, num_items=32, latent_dim=8, layers=[16, 32, 16, 8])
    batch = 8

    key = jax.random.PRNGKey(0)
    kp, ku, ki = jax.random.split(key, 3)
    params = init_params(kp, config["num_users"], config["num_items"],
                         config["latent_dim"], config["layers"])

    user_indices = jax.random.randint(ku, (batch,), 0, config["num_users"], jnp.int32)
    item_indices = jax.random.randint(ki, (batch,), 0, config["num_items"], jnp.int32)

    rating = ncf_mlp_forward(user_indices, item_indices, params)
    jax.block_until_ready(rating)

    ref = reference_forward(user_indices, item_indices, params)
    assert rating.shape == (batch, 1)
    err = float(jnp.max(jnp.abs(rating - ref)))
    assert jnp.allclose(rating, ref, atol=1e-4, rtol=1e-4), f"max abs err {err}"

    print("KERNEL_OK")
</pallas_src>

<mosaic_0001>
module attributes {stable_mosaic.version = 11 : i64} {
  func.func @_ncf_mlp_kernel(%arg0: i32, %arg1: memref<1x128xi32, #tpu.memory_space<vmem>>, %arg2: memref<1x128xi32, #tpu.memory_space<vmem>>, %arg3: memref<8x16xbf16, #tpu.memory_space<vmem>>, %arg4: memref<8x32xbf16, #tpu.memory_space<vmem>>, %arg5: memref<32x8xf32, #tpu.memory_space<vmem>>, %arg6: memref<32x8xf32, #tpu.memory_space<vmem>>, %arg7: memref<32x1xf32, #tpu.memory_space<vmem>>, %arg8: memref<16x32xf32, #tpu.memory_space<vmem>>, %arg9: memref<16x1xf32, #tpu.memory_space<vmem>>, %arg10: memref<8x16xf32, #tpu.memory_space<vmem>>, %arg11: memref<8x1xf32, #tpu.memory_space<vmem>>, %arg12: memref<8x1xf32, #tpu.memory_space<vmem>>, %arg13: memref<1x1xf32, #tpu.memory_space<vmem>>, %arg14: memref<1x128xf32, #tpu.memory_space<vmem>>) attributes {dimension_semantics = [#tpu.dimension_semantics<parallel>], iteration_bounds = array<i64: 1>, scalar_prefetch = 0 : i64, scratch_operands = 0 : i64, tpu.core_type = #tpu.core_type<tc>, window_params = [{transform_indices = @transform_0, window_bounds = array<i64: 1, 128>}, {transform_indices = @transform_1, window_bounds = array<i64: 1, 128>}, {pipeline_mode = #tpu.pipeline_mode<synchronous>, transform_indices = @transform_2, window_bounds = array<i64: 8, 16>}, {pipeline_mode = #tpu.pipeline_mode<synchronous>, transform_indices = @transform_3, window_bounds = array<i64: 8, 32>}, {pipeline_mode = #tpu.pipeline_mode<synchronous>, transform_indices = @transform_4, window_bounds = array<i64: 32, 8>}, {pipeline_mode = #tpu.pipeline_mode<synchronous>, transform_indices = @transform_5, window_bounds = array<i64: 32, 8>}, {pipeline_mode = #tpu.pipeline_mode<synchronous>, transform_indices = @transform_6, window_bounds = array<i64: 32, 1>}, {pipeline_mode = #tpu.pipeline_mode<synchronous>, transform_indices = @transform_7, window_bounds = array<i64: 16, 32>}, {pipeline_mode = #tpu.pipeline_mode<synchronous>, transform_indices = @transform_8, window_bounds = array<i64: 16, 1>}, {pipeline_mode = #tpu.pipeline_mode<synchronous>, transform_indices = @transform_9, window_bounds = array<i64: 8, 16>}, {pipeline_mode = #tpu.pipeline_mode<synchronous>, transform_indices = @transform_10, window_bounds = array<i64: 8, 1>}, {pipeline_mode = #tpu.pipeline_mode<synchronous>, transform_indices = @transform_11, window_bounds = array<i64: 8, 1>}, {pipeline_mode = #tpu.pipeline_mode<synchronous>, transform_indices = @transform_12, window_bounds = array<i64: 1, 1>}, {transform_indices = @transform_13, window_bounds = array<i64: 1, 128>}]} {
    %0 = tpu.iota {dimensions = array<i32: 0>} : vector<16x128xi32>
    %c0 = arith.constant 0 : index
    %c0_0 = arith.constant 0 : index
    %1 = vector.load %arg1[%c0, %c0_0] : memref<1x128xi32, #tpu.memory_space<vmem>>, vector<1x128xi32>
    %2 = vector.broadcast %1 : vector<1x128xi32> to vector<16x128xi32>
    %3 = arith.cmpi eq, %0, %2 : vector<16x128xi32>
    %cst = arith.constant 1.000000e+00 : f32
    %cst_1 = arith.constant 0.000000e+00 : f32
    %4 = vector.broadcast %cst : f32 to vector<16x128xf32>
    %5 = vector.broadcast %cst_1 : f32 to vector<16x128xf32>
    %6 = arith.select %3, %4, %5 : vector<16x128xi1>, vector<16x128xf32>
    %7 = tpu.iota {dimensions = array<i32: 0>} : vector<32x128xi32>
    %c0_2 = arith.constant 0 : index
    %c0_3 = arith.constant 0 : index
    %8 = vector.load %arg2[%c0_2, %c0_3] : memref<1x128xi32, #tpu.memory_space<vmem>>, vector<1x128xi32>
    %9 = vector.broadcast %8 : vector<1x128xi32> to vector<32x128xi32>
    %10 = arith.cmpi eq, %7, %9 : vector<32x128xi32>
    %cst_4 = arith.constant 1.000000e+00 : f32
    %cst_5 = arith.constant 0.000000e+00 : f32
    %11 = vector.broadcast %cst_4 : f32 to vector<32x128xf32>
    %12 = vector.broadcast %cst_5 : f32 to vector<32x128xf32>
    %13 = arith.select %10, %11, %12 : vector<32x128xi1>, vector<32x128xf32>
    %c0_6 = arith.constant 0 : index
    %c0_7 = arith.constant 0 : index
    %14 = vector.load %arg3[%c0_6, %c0_7] : memref<8x16xbf16, #tpu.memory_space<vmem>>, vector<8x16xbf16>
    %15 = arith.extf %14 : vector<8x16xbf16> to vector<8x16xf32>
    %cst_8 = arith.constant dense<0.000000e+00> : vector<8x128xf32>
    %16 = tpu.matmul %15, %6, %cst_8 {dimension_numbers = #tpu.dot_dimension_numbers<[1], [0], [0], [1], [0, 0, 1, 1], [], []>} : vector<8x16xf32>, vector<16x128xf32>, vector<8x128xf32> -> vector<8x128xf32>
    %c0_9 = arith.constant 0 : index
    %c0_10 = arith.constant 0 : index
    %17 = vector.load %arg4[%c0_9, %c0_10] : memref<8x32xbf16, #tpu.memory_space<vmem>>, vector<8x32xbf16>
    %18 = arith.extf %17 : vector<8x32xbf16> to vector<8x32xf32>
    %cst_11 = arith.constant dense<0.000000e+00> : vector<8x128xf32>
    %19 = tpu.matmul %18, %13, %cst_11 {dimension_numbers = #tpu.dot_dimension_numbers<[1], [0], [0], [1], [0, 0, 1, 1], [], []>} : vector<8x32xf32>, vector<32x128xf32>, vector<8x128xf32> -> vector<8x128xf32>
    %c0_12 = arith.constant 0 : index
    %c0_13 = arith.constant 0 : index
    %20 = vector.load %arg5[%c0_12, %c0_13] : memref<32x8xf32, #tpu.memory_space<vmem>>, vector<32x8xf32>
    %cst_14 = arith.constant dense<0.000000e+00> : vector<32x128xf32>
    %21 = tpu.matmul %20, %16, %cst_14 {dimension_numbers = #tpu.dot_dimension_numbers<[1], [0], [0], [1], [0, 0, 1, 1], [], []>} : vector<32x8xf32>, vector<8x128xf32>, vector<32x128xf32> -> vector<32x128xf32>
    %c0_15 = arith.constant 0 : index
    %c0_16 = arith.constant 0 : index
    %22 = vector.load %arg6[%c0_15, %c0_16] : memref<32x8xf32, #tpu.memory_space<vmem>>, vector<32x8xf32>
    %cst_17 = arith.constant dense<0.000000e+00> : vector<32x128xf32>
    %23 = tpu.matmul %22, %19, %cst_17 {dimension_numbers = #tpu.dot_dimension_numbers<[1], [0], [0], [1], [0, 0, 1, 1], [], []>} : vector<32x8xf32>, vector<8x128xf32>, vector<32x128xf32> -> vector<32x128xf32>
    %24 = arith.addf %21, %23 : vector<32x128xf32>
    %c0_18 = arith.constant 0 : index
    %c0_19 = arith.constant 0 : index
    %25 = vector.load %arg7[%c0_18, %c0_19] : memref<32x1xf32, #tpu.memory_space<vmem>>, vector<32x1xf32>
    %26 = vector.broadcast %25 : vector<32x1xf32> to vector<32x128xf32>
    %27 = arith.addf %24, %26 : vector<32x128xf32>
    %cst_20 = arith.constant 0.000000e+00 : f32
    %28 = vector.broadcast %cst_20 : f32 to vector<32x128xf32>
    %29 = arith.maximumf %27, %28 : vector<32x128xf32>
    %c0_21 = arith.constant 0 : index
    %c0_22 = arith.constant 0 : index
    %30 = vector.load %arg8[%c0_21, %c0_22] : memref<16x32xf32, #tpu.memory_space<vmem>>, vector<16x32xf32>
    %cst_23 = arith.constant dense<0.000000e+00> : vector<16x128xf32>
    %31 = tpu.matmul %30, %29, %cst_23 {dimension_numbers = #tpu.dot_dimension_numbers<[1], [0], [0], [1], [0, 0, 1, 1], [], []>} : vector<16x32xf32>, vector<32x128xf32>, vector<16x128xf32> -> vector<16x128xf32>
    %c0_24 = arith.constant 0 : index
    %c0_25 = arith.constant 0 : index
    %32 = vector.load %arg9[%c0_24, %c0_25] : memref<16x1xf32, #tpu.memory_space<vmem>>, vector<16x1xf32>
    %33 = vector.broadcast %32 : vector<16x1xf32> to vector<16x128xf32>
    %34 = arith.addf %31, %33 : vector<16x128xf32>
    %cst_26 = arith.constant 0.000000e+00 : f32
    %35 = vector.broadcast %cst_26 : f32 to vector<16x128xf32>
    %36 = arith.maximumf %34, %35 : vector<16x128xf32>
    %c0_27 = arith.constant 0 : index
    %c0_28 = arith.constant 0 : index
    %37 = vector.load %arg10[%c0_27, %c0_28] : memref<8x16xf32, #tpu.memory_space<vmem>>, vector<8x16xf32>
    %cst_29 = arith.constant dense<0.000000e+00> : vector<8x128xf32>
    %38 = tpu.matmul %37, %36, %cst_29 {dimension_numbers = #tpu.dot_dimension_numbers<[1], [0], [0], [1], [0, 0, 1, 1], [], []>} : vector<8x16xf32>, vector<16x128xf32>, vector<8x128xf32> -> vector<8x128xf32>
    %c0_30 = arith.constant 0 : index
    %c0_31 = arith.constant 0 : index
    %39 = vector.load %arg11[%c0_30, %c0_31] : memref<8x1xf32, #tpu.memory_space<vmem>>, vector<8x1xf32>
    %40 = vector.broadcast %39 : vector<8x1xf32> to vector<8x128xf32>
    %41 = arith.addf %38, %40 : vector<8x128xf32>
    %cst_32 = arith.constant 0.000000e+00 : f32
    %42 = vector.broadcast %cst_32 : f32 to vector<8x128xf32>
    %43 = arith.maximumf %41, %42 : vector<8x128xf32>
    %c0_33 = arith.constant 0 : index
    %c0_34 = arith.constant 0 : index
    %44 = vector.load %arg12[%c0_33, %c0_34] : memref<8x1xf32, #tpu.memory_space<vmem>>, vector<8x1xf32>
    %45 = vector.broadcast %44 : vector<8x1xf32> to vector<8x128xf32>
    %46 = arith.mulf %43, %45 : vector<8x128xf32>
    %cst_35 = arith.constant dense<0.000000e+00> : vector<128xf32>
    %47 = vector.multi_reduction <add>, %46, %cst_35 [0] : vector<8x128xf32> to vector<128xf32>
    %48 = vector.shape_cast %47 : vector<128xf32> to vector<1x128xf32>
    %c0_36 = arith.constant 0 : index
    %c0_37 = arith.constant 0 : index
    %49 = vector.load %arg13[%c0_36, %c0_37] : memref<1x1xf32, #tpu.memory_space<vmem>>, vector<1x1xf32>
    %50 = vector.broadcast %49 : vector<1x1xf32> to vector<1x128xf32>
    %51 = arith.addf %48, %50 : vector<1x128xf32>
    %52 = arith.negf %51 : vector<1x128xf32>
    %53 = math.exp %52 : vector<1x128xf32>
    %cst_38 = arith.constant 1.000000e+00 : f32
    %54 = vector.broadcast %cst_38 : f32 to vector<1x128xf32>
    %55 = arith.addf %54, %53 : vector<1x128xf32>
    %56 = arith.divf %54, %55 : vector<1x128xf32>
    %c0_39 = arith.constant 0 : index
    %c0_40 = arith.constant 0 : index
    %57 = vector.load %arg14[%c0_39, %c0_40] : memref<1x128xf32, #tpu.memory_space<vmem>>, vector<1x128xf32>
    tpu.vector_store %arg14[%c0_39, %c0_40], %56 {strides = array<i32>} : memref<1x128xf32, #tpu.memory_space<vmem>>, vector<1x128xf32>,
    return
  }
  func.func @transform_0(%arg0: i32) -> (i32, i32) {
    %c0_i32 = arith.constant 0 : i32
    %c0_i32_0 = arith.constant 0 : i32
    return %c0_i32, %arg0 : i32, i32
  }
  func.func @transform_1(%arg0: i32) -> (i32, i32) {
    %c0_i32 = arith.constant 0 : i32
    %c0_i32_0 = arith.constant 0 : i32
    return %c0_i32, %arg0 : i32, i32
  }
  func.func @transform_2(%arg0: i32) -> (i32, i32) {
    %c0_i32 = arith.constant 0 : i32
    %c0_i32_0 = arith.constant 0 : i32
    %c0_i32_1 = arith.constant 0 : i32
    return %c0_i32, %c0_i32_0 : i32, i32
  }
  func.func @transform_3(%arg0: i32) -> (i32, i32) {
    %c0_i32 = arith.constant 0 : i32
    %c0_i32_0 = arith.constant 0 : i32
    %c0_i32_1 = arith.constant 0 : i32
    return %c0_i32, %c0_i32_0 : i32, i32
  }
  func.func @transform_4(%arg0: i32) -> (i32, i32) {
    %c0_i32 = arith.constant 0 : i32
    %c0_i32_0 = arith.constant 0 : i32
    %c0_i32_1 = arith.constant 0 : i32
    return %c0_i32, %c0_i32_0 : i32, i32
  }
  func.func @transform_5(%arg0: i32) -> (i32, i32) {
    %c0_i32 = arith.constant 0 : i32
    %c0_i32_0 = arith.constant 0 : i32
    %c0_i32_1 = arith.constant 0 : i32
    return %c0_i32, %c0_i32_0 : i32, i32
  }
  func.func @transform_6(%arg0: i32) -> (i32, i32) {
    %c0_i32 = arith.constant 0 : i32
    %c0_i32_0 = arith.constant 0 : i32
    %c0_i32_1 = arith.constant 0 : i32
    return %c0_i32, %c0_i32_0 : i32, i32
  }
  func.func @transform_7(%arg0: i32) -> (i32, i32) {
    %c0_i32 = arith.constant 0 : i32
    %c0_i32_0 = arith.constant 0 : i32
    %c0_i32_1 = arith.constant 0 : i32
    return %c0_i32, %c0_i32_0 : i32, i32
  }
  func.func @transform_8(%arg0: i32) -> (i32, i32) {
    %c0_i32 = arith.constant 0 : i32
    %c0_i32_0 = arith.constant 0 : i32
    %c0_i32_1 = arith.constant 0 : i32
    return %c0_i32, %c0_i32_0 : i32, i32
  }
  func.func @transform_9(%arg0: i32) -> (i32, i32) {
    %c0_i32 = arith.constant 0 : i32
    %c0_i32_0 = arith.constant 0 : i32
    %c0_i32_1 = arith.constant 0 : i32
    return %c0_i32, %c0_i32_0 : i32, i32
  }
  func.func @transform_10(%arg0: i32) -> (i32, i32) {
    %c0_i32 = arith.constant 0 : i32
    %c0_i32_0 = arith.constant 0 : i32
    %c0_i32_1 = arith.constant 0 : i32
    return %c0_i32, %c0_i32_0 : i32, i32
  }
  func.func @transform_11(%arg0: i32) -> (i32, i32) {
    %c0_i32 = arith.constant 0 : i32
    %c0_i32_0 = arith.constant 0 : i32
    %c0_i32_1 = arith.constant 0 : i32
    return %c0_i32, %c0_i32_0 : i32, i32
  }
  func.func @transform_12(%arg0: i32) -> (i32, i32) {
    %c0_i32 = arith.constant 0 : i32
    %c0_i32_0 = arith.constant 0 : i32
    %c0_i32_1 = arith.constant 0 : i32
    return %c0_i32, %c0_i32_0 : i32, i32
  }
  func.func @transform_13(%arg0: i32) -> (i32, i32) {
    %c0_i32 = arith.constant 0 : i32
    %c0_i32_0 = arith.constant 0 : i32
    return %arg0, %c0_i32 : i32, i32
  }
}

</mosaic_0001>

<llo_original>
// kernel: ncf_mlp_forward.1
$region0: #{ncf_mlp_forward.1}
  #allocation0 [shape = 'u32[]', space=smem, size = 0x4, offset = 0x4, fixed_abs, tag = 'smem constant byte address 0x4 - core index']
  #allocation1 [shape = 'u32[144,128]{1,0:T(1,128)}', space=vmem, size = 0x12000, scoped, tag = 'internal scratch']
  #allocation2 [shape = 'f32[1,1]{1,0:T(1,128)S(1)}', space=vmem, size = 0x200, scoped, tag = 'scoped memory for ncf_mlp_forward.1']
  %s0 = inlined_call_operand.vmem [shape: s32[1,128], index: 0, kind: input, shape index: {}]
  %s1 = inlined_call_operand.vmem [shape: s32[1,128], index: 1, kind: input, shape index: {}]
  %s2 = inlined_call_operand.vmem [shape: bf16[8,16], index: 2, kind: input, shape index: {}]
  %s3 = inlined_call_operand.vmem [shape: bf16[8,32], index: 3, kind: input, shape index: {}]
  %s4 = inlined_call_operand.vmem [shape: f32[32,8], index: 4, kind: input, shape index: {}]
  %s5 = inlined_call_operand.vmem [shape: f32[32,8], index: 5, kind: input, shape index: {}]
  %s6 = inlined_call_operand.vmem [shape: f32[32,1], index: 6, kind: input, shape index: {}]
  %s7 = inlined_call_operand.vmem [shape: f32[16,32], index: 7, kind: input, shape index: {}]
  %s8 = inlined_call_operand.vmem [shape: f32[16,1], index: 8, kind: input, shape index: {}]
  %s9 = inlined_call_operand.vmem [shape: f32[8,16], index: 9, kind: input, shape index: {}]
  %s10 = inlined_call_operand.vmem [shape: f32[8,1], index: 10, kind: input, shape index: {}]
  %s11 = inlined_call_operand.vmem [shape: f32[8,1], index: 11, kind: input, shape index: {}]
  %s12 = inlined_call_operand.<no memory space> [shape: f32[1,1], index: 12, kind: input, shape index: {}]
  %s13 = inlined_call_operand.vmem [shape: f32[1,128], index: 13, kind: output, shape index: {}]
  %s14 = sld [smem:[#allocation0]]
  $region62: #{ncf_mlp_forward.1} parent=0
    _
  %s16 = ssub.s32 1, %s14
  %s17 = scalar_select 0, %s16, %s14
  %v18 = vstv %s12
  %19 = vst [vmem:[#allocation2] sm:$0x1] %v18
  // Predicated region
  $region2: #{ncf_mlp_forward.1} parent=0 // pred_check
    _
  $region3: #{ncf_mlp_forward.1} parent=0 // pred_check_branch
    %21 = sbr.rel (0) target = $region5
  $region4: #{ncf_mlp_forward.1} parent=0 // pred_region
    _
  $region5: #{ncf_mlp_forward.1} parent=0 // pred_fallthru
    _
  // Predicated region
  $region6: #{ncf_mlp_forward.1} parent=0 // pred_check
    _
  $region7: #{ncf_mlp_forward.1} parent=0 // pred_check_branch
    %23 = sbr.rel (0) target = $region9
  $region8: #{ncf_mlp_forward.1} parent=0 // pred_region
    _
  $region9: #{ncf_mlp_forward.1} parent=0 // pred_fallthru
    _
  // Predicated region
  $region10: #{ncf_mlp_forward.1} parent=0 // pred_check
    _
  $region11: #{ncf_mlp_forward.1} parent=0 // pred_check_branch
    %25 = sbr.rel (0) target = $region13
  $region12: #{ncf_mlp_forward.1} parent=0 // pred_region
    _
  $region13: #{ncf_mlp_forward.1} parent=0 // pred_fallthru
    _
  // Predicated region
  $region14: #{ncf_mlp_forward.1} parent=0 // pred_check
    _
  $region15: #{ncf_mlp_forward.1} parent=0 // pred_check_branch
    %27 = sbr.rel (0) target = $region17
  $region16: #{ncf_mlp_forward.1} parent=0 // pred_region
    _
  $region17: #{ncf_mlp_forward.1} parent=0 // pred_fallthru
    _
  // Predicated region
  $region18: #{ncf_mlp_forward.1} parent=0 // pred_check
    _
  $region19: #{ncf_mlp_forward.1} parent=0 // pred_check_branch
    %29 = sbr.rel (0) target = $region21
  $region20: #{ncf_mlp_forward.1} parent=0 // pred_region
    _
  $region21: #{ncf_mlp_forward.1} parent=0 // pred_fallthru
    _
  // Predicated region
  $region22: #{ncf_mlp_forward.1} parent=0 // pred_check
    _
  $region23: #{ncf_mlp_forward.1} parent=0 // pred_check_branch
    %31 = sbr.rel (0) target = $region25
  $region24: #{ncf_mlp_forward.1} parent=0 // pred_region
    _
  $region25: #{ncf_mlp_forward.1} parent=0 // pred_fallthru
    _
  // Predicated region
  $region26: #{ncf_mlp_forward.1} parent=0 // pred_check
    _
  $region27: #{ncf_mlp_forward.1} parent=0 // pred_check_branch
    %33 = sbr.rel (0) target = $region29
  $region28: #{ncf_mlp_forward.1} parent=0 // pred_region
    _
  $region29: #{ncf_mlp_forward.1} parent=0 // pred_fallthru
    _
  // Predicated region
  $region30: #{ncf_mlp_forward.1} parent=0 // pred_check
    _
  $region31: #{ncf_mlp_forward.1} parent=0 // pred_check_branch
    %35 = sbr.rel (0) target = $region33
  $region32: #{ncf_mlp_forward.1} parent=0 // pred_region
    _
  $region33: #{ncf_mlp_forward.1} parent=0 // pred_fallthru
    _
  // Predicated region
  $region34: #{ncf_mlp_forward.1} parent=0 // pred_check
    _
  $region35: #{ncf_mlp_forward.1} parent=0 // pred_check_branch
    %37 = sbr.rel (0) target = $region37
  $region36: #{ncf_mlp_forward.1} parent=0 // pred_region
    _
  $region37: #{ncf_mlp_forward.1} parent=0 // pred_fallthru
    _
  // Predicated region
  $region38: #{ncf_mlp_forward.1} parent=0 // pred_check
    _
  $region39: #{ncf_mlp_forward.1} parent=0 // pred_check_branch
    %39 = sbr.rel (0) target = $region41
  $region40: #{ncf_mlp_forward.1} parent=0 // pred_region
    _
  $region41: #{ncf_mlp_forward.1} parent=0 // pred_fallthru
    _
  // Predicated region
  $region42: #{ncf_mlp_forward.1} parent=0 // pred_check
    _
  $region43: #{ncf_mlp_forward.1} parent=0 // pred_check_branch
    %41 = sbr.rel (0) target = $region45
  $region44: #{ncf_mlp_forward.1} parent=0 // pred_region
    _
  $region45: #{ncf_mlp_forward.1} parent=0 // pred_fallthru
    _
  // Predicated region
  $region46: #{ncf_mlp_forward.1} parent=0 // pred_check
    _
  $region47: #{ncf_mlp_forward.1} parent=0 // pred_check_branch
    %43 = sbr.rel (0) target = $region49
  $region48: #{ncf_mlp_forward.1} parent=0 // pred_region
    _
  $region49: #{ncf_mlp_forward.1} parent=0 // pred_fallthru
    _
  // Predicated region
  $region50: #{ncf_mlp_forward.1} parent=0 // pred_check
    _
  $region51: #{ncf_mlp_forward.1} parent=0 // pred_check_branch
    %45 = sbr.rel (0) target = $region53
  $region52: #{ncf_mlp_forward.1} parent=0 // pred_region
    _
  $region53: #{ncf_mlp_forward.1} parent=0 // pred_fallthru
    _
  %v46 = vlaneseq
  %v47 = vshrl.u32 %v46, 7
  %v48 = vadd.s32 %v47, 8
  %v49 = vld [vmem:[%s0] sm:$0x1]
  %v50 = vlaneseq
  %v51 = vshrl.u32 %v50, 7
  %v52 = vsub.s32 0, %v51
  %v53 = vrot.slane %v49, %v52
  %vm54 = vcmp.eq.s32.totalorder %v47, %v53
  %vm55 = vcmp.eq.s32.totalorder %v48, %v53
  %v56 = vsel %vm54, 1.0, 0.0
  %v57 = vsel %vm55, 1.0, 0.0
  %v58 = vadd.s32 %v47, 16
  %v59 = vadd.s32 %v47, 24
  %v60 = vld [vmem:[%s1] sm:$0x1]
  %v61 = vlaneseq
  %v62 = vshrl.u32 %v61, 7
  %v63 = vsub.s32 0, %v62
  %v64 = vrot.slane %v60, %v63
  %vm65 = vcmp.eq.s32.totalorder %v47, %v64
  %vm66 = vcmp.eq.s32.totalorder %v48, %v64
  %vm67 = vcmp.eq.s32.totalorder %v58, %v64
  %vm68 = vcmp.eq.s32.totalorder %v59, %v64
  %v69 = vsel %vm65, 1.0, 0.0
  %v70 = vsel %vm66, 1.0, 0.0
  %v71 = vsel %vm67, 1.0, 0.0
  %v72 = vsel %vm68, 1.0, 0.0
  %v73 = vld [vmem:[%s2] sm:$0xf]
  %v74 = vunpack.c.l.bf16 %v73
  %vm75 = vcmask 130048
  %v77 = vsel %vm75, %v74, 0
  %79 = vmatprep.subr.mxu0 0.0
  %80 = vmatpush1.msra.mxu0 0.0
  %81 = vmatprep.subr.mxu0 0.0
  %82 = vmatpush1.msra.mxu0 0.0
  %83 = vmatprep.subr.mxu0 0.0
  %84 = vmatpush1.msra.mxu0 0.0
  %85 = vmatprep.subr.mxu0 0.0
  %86 = vmatpush1.msra.mxu0 0.0
  %87 = vmatprep.subr.mxu0 0.0
  %88 = vmatpush1.msra.mxu0 0.0
  %89 = vmatprep.subr.mxu0 0.0
  %90 = vmatpush1.msra.mxu0 0.0
  %91 = vmatprep.subr.mxu0 0.0
  %92 = vmatpush1.msra.mxu0 0.0
  %93 = vmatprep.subr.mxu0 0.0
  %94 = vmatpush1.msra.mxu0 0.0
  %95 = vmatprep.subr.mxu0 0.0
  %96 = vmatpush1.msra.mxu0 0.0
  %97 = vmatprep.subr.mxu0 0.0
  %98 = vmatpush1.msra.mxu0 0.0
  %99 = vmatprep.subr.mxu0 0.0
  %100 = vmatpush1.msra.mxu0 0.0
  %101 = vmatprep.subr.mxu0 0.0
  %102 = vmatpush1.msra.mxu0 0.0
  %103 = vmatprep.subr.mxu0 0.0
  %104 = vmatpush1.msra.mxu0 0.0
  %105 = vmatprep.subr.mxu0 0.0
  %106 = vmatpush1.msra.mxu0 0.0
  %107 = vmatprep.subr.mxu0 0.0
  %108 = vmatpush1.msra.mxu0 %v57
  %109 = vmatprep.subr.mxu0 0.0
  %110 = vmatpush1.msra.mxu0 %v56
  %111 = vmatprep.subr.mxu0 0.0
  %112 = vmatpush2.msra.mxu0 0.0
  %113 = vmatprep.subr.mxu0 0.0
  %114 = vmatpush2.msra.mxu0 0.0
  %115 = vmatprep.subr.mxu0 0.0
  %116 = vmatpush2.msra.mxu0 0.0
  %117 = vmatprep.subr.mxu0 0.0
  %118 = vmatpush2.msra.mxu0 0.0
  %119 = vmatprep.subr.mxu0 0.0
  %120 = vmatpush2.msra.mxu0 0.0
  %121 = vmatprep.subr.mxu0 0.0
  %122 = vmatpush2.msra.mxu0 0.0
  %123 = vmatprep.subr.mxu0 0.0
  %124 = vmatpush2.msra.mxu0 0.0
  %125 = vmatprep.subr.mxu0 0.0
  %126 = vmatpush2.msra.mxu0 0.0
  %127 = vmatprep.subr.mxu0 0.0
  %128 = vmatpush2.msra.mxu0 0.0
  %129 = vmatprep.subr.mxu0 0.0
  %130 = vmatpush2.msra.mxu0 0.0
  %131 = vmatprep.subr.mxu0 0.0
  %132 = vmatpush2.msra.mxu0 0.0
  %133 = vmatprep.subr.mxu0 0.0
  %134 = vmatpush2.msra.mxu0 0.0
  %135 = vmatprep.subr.mxu0 0.0
  %136 = vmatpush2.msra.mxu0 0.0
  %137 = vmatprep.subr.mxu0 0.0
  %138 = vmatpush2.msra.mxu0 0.0
  %139 = vmatprep.subr.mxu0 0.0
  %140 = vmatpush2.msra.mxu0 0.0
  %141 = vmatprep.subr.mxu0 0.0
  %142 = vmatpush2.msra.mxu0 0.0
  %143 = vmatprep.mubr.f32.mxu0 0.0
  %144 = vmatmul.mubr.f32.gmra.mxu0 %v77
  %v145 = vpop.f32.mrf.mxu0
  %v146 = vadd.f32 0.0, %v145
  %v147 = vpop.f32.mrf.mxu0
  %148 = vdwg.mxu0
  %v149 = vld [vmem:[%s3] sm:$0xf]
  %v150 = vunpack.c.l.bf16 %v149
  %vm151 = vcmask 261120
  %v153 = vsel %vm151, %v150, 0
  %155 = vmatprep.subr.mxu0 0.0
  %156 = vmatpush1.msra.mxu0 0.0
  %157 = vmatprep.subr.mxu0 0.0
  %158 = vmatpush1.msra.mxu0 0.0
  %159 = vmatprep.subr.mxu0 0.0
  %160 = vmatpush1.msra.mxu0 0.0
  %161 = vmatprep.subr.mxu0 0.0
  %162 = vmatpush1.msra.mxu0 0.0
  %163 = vmatprep.subr.mxu0 0.0
  %164 = vmatpush1.msra.mxu0 0.0
  %165 = vmatprep.subr.mxu0 0.0
  %166 = vmatpush1.msra.mxu0 0.0
  %167 = vmatprep.subr.mxu0 0.0
  %168 = vmatpush1.msra.mxu0 0.0
  %169 = vmatprep.subr.mxu0 0.0
  %170 = vmatpush1.msra.mxu0 0.0
  %171 = vmatprep.subr.mxu0 0.0
  %172 = vmatpush1.msra.mxu0 0.0
  %173 = vmatprep.subr.mxu0 0.0
  %174 = vmatpush1.msra.mxu0 0.0
  %175 = vmatprep.subr.mxu0 0.0
  %176 = vmatpush1.msra.mxu0 0.0
  %177 = vmatprep.subr.mxu0 0.0
  %178 = vmatpush1.msra.mxu0 0.0
  %179 = vmatprep.subr.mxu0 0.0
  %180 = vmatpush1.msra.mxu0 %v72
  %181 = vmatprep.subr.mxu0 0.0
  %182 = vmatpush1.msra.mxu0 %v71
  %183 = vmatprep.subr.mxu0 0.0
  %184 = vmatpush1.msra.mxu0 %v70
  %185 = vmatprep.subr.mxu0 0.0
  %186 = vmatpush1.msra.mxu0 %v69
  %187 = vmatprep.subr.mxu0 0.0
  %188 = vmatpush2.msra.mxu0 0.0
  %189 = vmatprep.subr.mxu0 0.0
  %190 = vmatpush2.msra.mxu0 0.0
  %191 = vmatprep.subr.mxu0 0.0
  %192 = vmatpush2.msra.mxu0 0.0
  %193 = vmatprep.subr.mxu0 0.0
  %194 = vmatpush2.msra.mxu0 0.0
  %195 = vmatprep.subr.mxu0 0.0
  %196 = vmatpush2.msra.mxu0 0.0
  %197 = vmatprep.subr.mxu0 0.0
  %198 = vmatpush2.msra.mxu0 0.0
  %199 = vmatprep.subr.mxu0 0.0
  %200 = vmatpush2.msra.mxu0 0.0
  %201 = vmatprep.subr.mxu0 0.0
  %202 = vmatpush2.msra.mxu0 0.0
  %203 = vmatprep.subr.mxu0 0.0
  %204 = vmatpush2.msra.mxu0 0.0
  %205 = vmatprep.subr.mxu0 0.0
  %206 = vmatpush2.msra.mxu0 0.0
  %207 = vmatprep.subr.mxu0 0.0
  %208 = vmatpush2.msra.mxu0 0.0
  %209 = vmatprep.subr.mxu0 0.0
  %210 = vmatpush2.msra.mxu0 0.0
  %211 = vmatprep.subr.mxu0 0.0
  %212 = vmatpush2.msra.mxu0 0.0
  %213 = vmatprep.subr.mxu0 0.0
  %214 = vmatpush2.msra.mxu0 0.0
  %215 = vmatprep.subr.mxu0 0.0
  %216 = vmatpush2.msra.mxu0 0.0
  %217 = vmatprep.subr.mxu0 0.0
  %218 = vmatpush2.msra.mxu0 0.0
  %219 = vmatprep.mubr.f32.mxu0 0.0
  %220 = vmatmul.mubr.f32.gmra.mxu0 %v153
  %v221 = vpop.f32.mrf.mxu0
  %v222 = vadd.f32 0.0, %v221
  %v223 = vpop.f32.mrf.mxu0
  %224 = vdwg.mxu0
  %v225 = vld [vmem:[%s4] sm:$0xff]
  %v226 = vld [vmem:[%s4 + $0x8] sm:$0xff]
  %v227 = vld [vmem:[%s4 + $0x10] sm:$0xff]
  %v228 = vld [vmem:[%s4 + $0x18] sm:$0xff]
  %v229 = vld [vmem:[%s5] sm:$0xff]
  %v230 = vld [vmem:[%s5 + $0x8] sm:$0xff]
  %v231 = vld [vmem:[%s5 + $0x10] sm:$0xff]
  %v232 = vld [vmem:[%s5 + $0x18] sm:$0xff]
  %vm233 = vcmask 64512
  %v235 = vsel %vm233, %v229, 0
  %v238 = vsel %vm233, %v230, 0
  %v241 = vsel %vm233, %v231, 0
  %v244 = vsel %vm233, %v232, 0
  %246 = vmatprep.subr.mxu0 0.0
  %247 = vmatpush1.msra.mxu0 0.0
  %248 = vmatprep.subr.mxu0 0.0
  %249 = vmatpush1.msra.mxu0 0.0
  %250 = vmatprep.subr.mxu0 0.0
  %251 = vmatpush1.msra.mxu0 0.0
  %252 = vmatprep.subr.mxu0 0.0
  %253 = vmatpush1.msra.mxu0 0.0
  %254 = vmatprep.subr.mxu0 0.0
  %255 = vmatpush1.msra.mxu0 0.0
  %256 = vmatprep.subr.mxu0 0.0
  %257 = vmatpush1.msra.mxu0 0.0
  %258 = vmatprep.subr.mxu0 0.0
  %259 = vmatpush1.msra.mxu0 0.0
  %260 = vmatprep.subr.mxu0 0.0
  %261 = vmatpush1.msra.mxu0 0.0
  %262 = vmatprep.subr.mxu0 0.0
  %263 = vmatpush1.msra.mxu0 0.0
  %264 = vmatprep.subr.mxu0 0.0
  %265 = vmatpush1.msra.mxu0 0.0
  %266 = vmatprep.subr.mxu0 0.0
  %267 = vmatpush1.msra.mxu0 0.0
  %268 = vmatprep.subr.mxu0 0.0
  %269 = vmatpush1.msra.mxu0 0.0
  %270 = vmatprep.subr.mxu0 0.0
  %271 = vmatpush1.msra.mxu0 0.0
  %272 = vmatprep.subr.mxu0 0.0
  %273 = vmatpush1.msra.mxu0 0.0
  %274 = vmatprep.subr.mxu0 0.0
  %275 = vmatpush1.msra.mxu0 0.0
  %276 = vmatprep.subr.mxu0 0.0
  %277 = vmatpush1.msra.mxu0 %v222
  %278 = vmatprep.subr.mxu0 0.0
  %279 = vmatpush2.msra.mxu0 0.0
  %280 = vmatprep.subr.mxu0 0.0
  %281 = vmatpush2.msra.mxu0 0.0
  %282 = vmatprep.subr.mxu0 0.0
  %283 = vmatpush2.msra.mxu0 0.0
  %284 = vmatprep.subr.mxu0 0.0
  %285 = vmatpush2.msra.mxu0 0.0
  %286 = vmatprep.subr.mxu0 0.0
  %287 = vmatpush2.msra.mxu0 0.0
  %288 = vmatprep.subr.mxu0 0.0
  %289 = vmatpush2.msra.mxu0 0.0
  %290 = vmatprep.subr.mxu0 0.0
  %291 = vmatpush2.msra.mxu0 0.0
  %292 = vmatprep.subr.mxu0 0.0
  %293 = vmatpush2.msra.mxu0 0.0
  %294 = vmatprep.subr.mxu0 0.0
  %295 = vmatpush2.msra.mxu0 0.0
  %296 = vmatprep.subr.mxu0 0.0
  %297 = vmatpush2.msra.mxu0 0.0
  %298 = vmatprep.subr.mxu0 0.0
  %299 = vmatpush2.msra.mxu0 0.0
  %300 = vmatprep.subr.mxu0 0.0
  %301 = vmatpush2.msra.mxu0 0.0
  %302 = vmatprep.subr.mxu0 0.0
  %303 = vmatpush2.msra.mxu0 0.0
  %304 = vmatprep.subr.mxu0 0.0
  %305 = vmatpush2.msra.mxu0 0.0
  %306 = vmatprep.subr.mxu0 0.0
  %307 = vmatpush2.msra.mxu0 0.0
  %308 = vmatprep.subr.mxu0 0.0
  %309 = vmatpush2.msra.mxu0 0.0
  %310 = vmatprep.mubr.f32.mxu0 0.0
  %311 = vmatmul.mubr.f32.gmra.mxu0 %v235
  %v312 = vpop.f32.mrf.mxu0
  %v313 = vadd.f32 0.0, %v312
  %v314 = vpop.f32.mrf.mxu0
  %315 = vmatprep.mubr.f32.mxu0 0.0
  %316 = vmatmul.mubr.f32.gmra.mxu0 %v238
  %v317 = vpop.f32.mrf.mxu0
  %v318 = vadd.f32 0.0, %v317
  %v319 = vpop.f32.mrf.mxu0
  %320 = vmatprep.mubr.f32.mxu0 0.0
  %321 = vmatmul.mubr.f32.gmra.mxu0 %v241
  %v322 = vpop.f32.mrf.mxu0
  %v323 = vadd.f32 0.0, %v322
  %v324 = vpop.f32.mrf.mxu0
  %325 = vmatprep.mubr.f32.mxu0 0.0
  %326 = vmatmul.mubr.f32.gmra.mxu0 %v244
  %v327 = vpop.f32.mrf.mxu0
  %v328 = vadd.f32 0.0, %v327
  %v329 = vpop.f32.mrf.mxu0
  %330 = vdwg.mxu0
  %v332 = vsel %vm233, %v225, 0
  %v335 = vsel %vm233, %v226, 0
  %v338 = vsel %vm233, %v227, 0
  %v341 = vsel %vm233, %v228, 0
  %343 = vmatprep.subr.mxu0 0.0
  %344 = vmatpush1.msra.mxu0 0.0
  %345 = vmatprep.subr.mxu0 0.0
  %346 = vmatpush1.msra.mxu0 0.0
  %347 = vmatprep.subr.mxu0 0.0
  %348 = vmatpush1.msra.mxu0 0.0
  %349 = vmatprep.subr.mxu0 0.0
  %350 = vmatpush1.msra.mxu0 0.0
  %351 = vmatprep.subr.mxu0 0.0
  %352 = vmatpush1.msra.mxu0 0.0
  %353 = vmatprep.subr.mxu0 0.0
  %354 = vmatpush1.msra.mxu0 0.0
  %355 = vmatprep.subr.mxu0 0.0
  %356 = vmatpush1.msra.mxu0 0.0
  %357 = vmatprep.subr.mxu0 0.0
  %358 = vmatpush1.msra.mxu0 0.0
  %359 = vmatprep.subr.mxu0 0.0
  %360 = vmatpush1.msra.mxu0 0.0
  %361 = vmatprep.subr.mxu0 0.0
  %362 = vmatpush1.msra.mxu0 0.0
  %363 = vmatprep.subr.mxu0 0.0
  %364 = vmatpush1.msra.mxu0 0.0
  %365 = vmatprep.subr.mxu0 0.0
  %366 = vmatpush1.msra.mxu0 0.0
  %367 = vmatprep.subr.mxu0 0.0
  %368 = vmatpush1.msra.mxu0 0.0
  %369 = vmatprep.subr.mxu0 0.0
  %370 = vmatpush1.msra.mxu0 0.0
  %371 = vmatprep.subr.mxu0 0.0
  %372 = vmatpush1.msra.mxu0 0.0
  %373 = vmatprep.subr.mxu0 0.0
  %374 = vmatpush1.msra.mxu0 %v146
  %375 = vmatprep.subr.mxu0 0.0
  %376 = vmatpush2.msra.mxu0 0.0
  %377 = vmatprep.subr.mxu0 0.0
  %378 = vmatpush2.msra.mxu0 0.0
  %379 = vmatprep.subr.mxu0 0.0
  %380 = vmatpush2.msra.mxu0 0.0
  %381 = vmatprep.subr.mxu0 0.0
  %382 = vmatpush2.msra.mxu0 0.0
  %383 = vmatprep.subr.mxu0 0.0
  %384 = vmatpush2.msra.mxu0 0.0
  %385 = vmatprep.subr.mxu0 0.0
  %386 = vmatpush2.msra.mxu0 0.0
  %387 = vmatprep.subr.mxu0 0.0
  %388 = vmatpush2.msra.mxu0 0.0
  %389 = vmatprep.subr.mxu0 0.0
  %390 = vmatpush2.msra.mxu0 0.0
  %391 = vmatprep.subr.mxu0 0.0
  %392 = vmatpush2.msra.mxu0 0.0
  %393 = vmatprep.subr.mxu0 0.0
  %394 = vmatpush2.msra.mxu0 0.0
  %395 = vmatprep.subr.mxu0 0.0
  %396 = vmatpush2.msra.mxu0 0.0
  %397 = vmatprep.subr.mxu0 0.0
  %398 = vmatpush2.msra.mxu0 0.0
  %399 = vmatprep.subr.mxu0 0.0
  %400 = vmatpush2.msra.mxu0 0.0
  %401 = vmatprep.subr.mxu0 0.0
  %402 = vmatpush2.msra.mxu0 0.0
  %403 = vmatprep.subr.mxu0 0.0
  %404 = vmatpush2.msra.mxu0 0.0
  %405 = vmatprep.subr.mxu0 0.0
  %406 = vmatpush2.msra.mxu0 0.0
  %407 = vmatprep.mubr.f32.mxu0 0.0
  %408 = vmatmul.mubr.f32.gmra.mxu0 %v332
  %v409 = vpop.f32.mrf.mxu0
  %v410 = vadd.f32 %v313, %v409
  %v411 = vpop.f32.mrf.mxu0
  %412 = vmatprep.mubr.f32.mxu0 0.0
  %413 = vmatmul.mubr.f32.gmra.mxu0 %v335
  %v414 = vpop.f32.mrf.mxu0
  %v415 = vadd.f32 %v318, %v414
  %v416 = vpop.f32.mrf.mxu0
  %417 = vmatprep.mubr.f32.mxu0 0.0
  %418 = vmatmul.mubr.f32.gmra.mxu0 %v338
  %v419 = vpop.f32.mrf.mxu0
  %v420 = vadd.f32 %v323, %v419
  %v421 = vpop.f32.mrf.mxu0
  %422 = vmatprep.mubr.f32.mxu0 0.0
  %423 = vmatmul.mubr.f32.gmra.mxu0 %v341
  %v424 = vpop.f32.mrf.mxu0
  %v425 = vadd.f32 %v328, %v424
  %v426 = vpop.f32.mrf.mxu0
  %427 = vdwg.mxu0
  %v428 = vld [vmem:[%s6] sm:$0xff]
  %v429 = vld [vmem:[%s6 + $0x8] sm:$0xff]
  %v430 = vld [vmem:[%s6 + $0x10] sm:$0xff]
  %v431 = vld [vmem:[%s6 + $0x18] sm:$0xff]
  %433 = vset.pattern.permute.xlu0 0
  %434 = vperm.xlu0 %433, %v428
  %v435 = vpop.permute.xlu0 %434
  %438 = vset.pattern.permute.xlu0 0
  %439 = vperm.xlu0 %438, %v429
  %v440 = vpop.permute.xlu0 %439
  %443 = vset.pattern.permute.xlu0 0
  %444 = vperm.xlu0 %443, %v430
  %v445 = vpop.permute.xlu0 %444
  %448 = vset.pattern.permute.xlu0 0
  %449 = vperm.xlu0 %448, %v431
  %v450 = vpop.permute.xlu0 %449
  %v452 = vadd.f32 %v410, %v435
  %v453 = vadd.f32 %v415, %v440
  %v454 = vadd.f32 %v420, %v445
  %v455 = vadd.f32 %v425, %v450
  %v456 = vmax.f32 %v452, 0.0
  %v457 = vmax.f32 %v453, 0.0
  %v458 = vmax.f32 %v454, 0.0
  %v459 = vmax.f32 %v455, 0.0
  %v460 = vld [vmem:[%s7] sm:$0xff]
  %v461 = vld [vmem:[%s7 + $0x8] sm:$0xff]
  %v462 = vld [vmem:[%s8] sm:$0xff]
  %v463 = vld [vmem:[%s8 + $0x8] sm:$0xff]
  %465 = vset.pattern.permute.xlu0 0
  %466 = vperm.xlu0 %465, %v462
  %v467 = vpop.permute.xlu0 %466
  %470 = vset.pattern.permute.xlu0 0
  %471 = vperm.xlu0 %470, %v463
  %v472 = vpop.permute.xlu0 %471
  %v475 = vsel %vm151, %v460, 0
  %v478 = vsel %vm151, %v461, 0
  %480 = vmatprep.subr.mxu0 0.0
  %481 = vmatpush1.msra.mxu0 0.0
  %482 = vmatprep.subr.mxu0 0.0
  %483 = vmatpush1.msra.mxu0 0.0
  %484 = vmatprep.subr.mxu0 0.0
  %485 = vmatpush1.msra.mxu0 0.0
  %486 = vmatprep.subr.mxu0 0.0
  %487 = vmatpush1.msra.mxu0 0.0
  %488 = vmatprep.subr.mxu0 0.0
  %489 = vmatpush1.msra.mxu0 0.0
  %490 = vmatprep.subr.mxu0 0.0
  %491 = vmatpush1.msra.mxu0 0.0
  %492 = vmatprep.subr.mxu0 0.0
  %493 = vmatpush1.msra.mxu0 0.0
  %494 = vmatprep.subr.mxu0 0.0
  %495 = vmatpush1.msra.mxu0 0.0
  %496 = vmatprep.subr.mxu0 0.0
  %497 = vmatpush1.msra.mxu0 0.0
  %498 = vmatprep.subr.mxu0 0.0
  %499 = vmatpush1.msra.mxu0 0.0
  %500 = vmatprep.subr.mxu0 0.0
  %501 = vmatpush1.msra.mxu0 0.0
  %502 = vmatprep.subr.mxu0 0.0
  %503 = vmatpush1.msra.mxu0 0.0
  %504 = vmatprep.subr.mxu0 0.0
  %505 = vmatpush1.msra.mxu0 %v459
  %506 = vmatprep.subr.mxu0 0.0
  %507 = vmatpush1.msra.mxu0 %v458
  %508 = vmatprep.subr.mxu0 0.0
  %509 = vmatpush1.msra.mxu0 %v457
  %510 = vmatprep.subr.mxu0 0.0
  %511 = vmatpush1.msra.mxu0 %v456
  %512 = vmatprep.subr.mxu0 0.0
  %513 = vmatpush2.msra.mxu0 0.0
  %514 = vmatprep.subr.mxu0 0.0
  %515 = vmatpush2.msra.mxu0 0.0
  %516 = vmatprep.subr.mxu0 0.0
  %517 = vmatpush2.msra.mxu0 0.0
  %518 = vmatprep.subr.mxu0 0.0
  %519 = vmatpush2.msra.mxu0 0.0
  %520 = vmatprep.subr.mxu0 0.0
  %521 = vmatpush2.msra.mxu0 0.0
  %522 = vmatprep.subr.mxu0 0.0
  %523 = vmatpush2.msra.mxu0 0.0
  %524 = vmatprep.subr.mxu0 0.0
  %525 = vmatpush2.msra.mxu0 0.0
  %526 = vmatprep.subr.mxu0 0.0
  %527 = vmatpush2.msra.mxu0 0.0
  %528 = vmatprep.subr.mxu0 0.0
  %529 = vmatpush2.msra.mxu0 0.0
  %530 = vmatprep.subr.mxu0 0.0
  %531 = vmatpush2.msra.mxu0 0.0
  %532 = vmatprep.subr.mxu0 0.0
  %533 = vmatpush2.msra.mxu0 0.0
  %534 = vmatprep.subr.mxu0 0.0
  %535 = vmatpush2.msra.mxu0 0.0
  %536 = vmatprep.subr.mxu0 0.0
  %537 = vmatpush2.msra.mxu0 0.0
  %538 = vmatprep.subr.mxu0 0.0
  %539 = vmatpush2.msra.mxu0 0.0
  %540 = vmatprep.subr.mxu0 0.0
  %541 = vmatpush2.msra.mxu0 0.0
  %542 = vmatprep.subr.mxu0 0.0
  %543 = vmatpush2.msra.mxu0 0.0
  %544 = vmatprep.mubr.f32.mxu0 0.0
  %545 = vmatmul.mubr.f32.gmra.mxu0 %v475
  %v546 = vpop.f32.mrf.mxu0
  %v547 = vadd.f32 %v467, %v546
  %v548 = vpop.f32.mrf.mxu0
  %549 = vmatprep.mubr.f32.mxu0 0.0
  %550 = vmatmul.mubr.f32.gmra.mxu0 %v478
  %v551 = vpop.f32.mrf.mxu0
  %v552 = vadd.f32 %v472, %v551
  %v553 = vpop.f32.mrf.mxu0
  %554 = vdwg.mxu0
  %v555 = vmax.f32 %v547, 0.0
  %v556 = vmax.f32 %v552, 0.0
  %v557 = vld [vmem:[%s9] sm:$0xff]
  %v558 = vld [vmem:[%s10] sm:$0xff]
  %560 = vset.pattern.permute.xlu0 0
  %561 = vperm.xlu0 %560, %v558
  %v562 = vpop.permute.xlu0 %561
  %v565 = vsel %vm75, %v557, 0
  %567 = vmatprep.subr.mxu0 0.0
  %568 = vmatpush1.msra.mxu0 0.0
  %569 = vmatprep.subr.mxu0 0.0
  %570 = vmatpush1.msra.mxu0 0.0
  %571 = vmatprep.subr.mxu0 0.0
  %572 = vmatpush1.msra.mxu0 0.0
  %573 = vmatprep.subr.mxu0 0.0
  %574 = vmatpush1.msra.mxu0 0.0
  %575 = vmatprep.subr.mxu0 0.0
  %576 = vmatpush1.msra.mxu0 0.0
  %577 = vmatprep.subr.mxu0 0.0
  %578 = vmatpush1.msra.mxu0 0.0
  %579 = vmatprep.subr.mxu0 0.0
  %580 = vmatpush1.msra.mxu0 0.0
  %581 = vmatprep.subr.mxu0 0.0
  %582 = vmatpush1.msra.mxu0 0.0
  %583 = vmatprep.subr.mxu0 0.0
  %584 = vmatpush1.msra.mxu0 0.0
  %585 = vmatprep.subr.mxu0 0.0
  %586 = vmatpush1.msra.mxu0 0.0
  %587 = vmatprep.subr.mxu0 0.0
  %588 = vmatpush1.msra.mxu0 0.0
  %589 = vmatprep.subr.mxu0 0.0
  %590 = vmatpush1.msra.mxu0 0.0
  %591 = vmatprep.subr.mxu0 0.0
  %592 = vmatpush1.msra.mxu0 0.0
  %593 = vmatprep.subr.mxu0 0.0
  %594 = vmatpush1.msra.mxu0 0.0
  %595 = vmatprep.subr.mxu0 0.0
  %596 = vmatpush1.msra.mxu0 %v556
  %597 = vmatprep.subr.mxu0 0.0
  %598 = vmatpush1.msra.mxu0 %v555
  %599 = vmatprep.subr.mxu0 0.0
  %600 = vmatpush2.msra.mxu0 0.0
  %601 = vmatprep.subr.mxu0 0.0
  %602 = vmatpush2.msra.mxu0 0.0
  %603 = vmatprep.subr.mxu0 0.0
  %604 = vmatpush2.msra.mxu0 0.0
  %605 = vmatprep.subr.mxu0 0.0
  %606 = vmatpush2.msra.mxu0 0.0
  %607 = vmatprep.subr.mxu0 0.0
  %608 = vmatpush2.msra.mxu0 0.0
  %609 = vmatprep.subr.mxu0 0.0
  %610 = vmatpush2.msra.mxu0 0.0
  %611 = vmatprep.subr.mxu0 0.0
  %612 = vmatpush2.msra.mxu0 0.0
  %613 = vmatprep.subr.mxu0 0.0
  %614 = vmatpush2.msra.mxu0 0.0
  %615 = vmatprep.subr.mxu0 0.0
  %616 = vmatpush2.msra.mxu0 0.0
  %617 = vmatprep.subr.mxu0 0.0
  %618 = vmatpush2.msra.mxu0 0.0
  %619 = vmatprep.subr.mxu0 0.0
  %620 = vmatpush2.msra.mxu0 0.0
  %621 = vmatprep.subr.mxu0 0.0
  %622 = vmatpush2.msra.mxu0 0.0
  %623 = vmatprep.subr.mxu0 0.0
  %624 = vmatpush2.msra.mxu0 0.0
  %625 = vmatprep.subr.mxu0 0.0
  %626 = vmatpush2.msra.mxu0 0.0
  %627 = vmatprep.subr.mxu0 0.0
  %628 = vmatpush2.msra.mxu0 0.0
  %629 = vmatprep.subr.mxu0 0.0
  %630 = vmatpush2.msra.mxu0 0.0
  %631 = vmatprep.mubr.f32.mxu0 0.0
  %632 = vmatmul.mubr.f32.gmra.mxu0 %v565
  %v633 = vpop.f32.mrf.mxu0
  %v634 = vadd.f32 %v562, %v633
  %v635 = vpop.f32.mrf.mxu0
  %636 = vdwg.mxu0
  %v637 = vmax.f32 %v634, 0.0
  %v638 = vld [vmem:[%s11] sm:$0xff]
  %640 = vset.pattern.permute.xlu0 0
  %641 = vperm.xlu0 %640, %v638
  %v642 = vpop.permute.xlu0 %641
  %v644 = vmul.f32 %v637, %v642
  %v645 = vrot.slane %v644, 4
  %v646 = vadd.f32 %v644, %v645
  %v647 = vrot.slane %v646, 2
  %v648 = vadd.f32 %v646, %v647
  %v649 = vrot.slane %v648, 1
  %v650 = vadd.f32 %v648, %v649
  %v651 = vld [vmem:[#allocation2] sm:$0x1]
  %653 = vset.pattern.permute.xlu0 0
  %654 = vperm.xlu0 %653, %v651
  %v655 = vpop.permute.xlu0 %654
  %v657 = vlaneseq
  %v658 = vshrl.u32 %v657, 7
  %v659 = vsub.s32 0, %v658
  %v660 = vrot.slane %v655, %v659
  %v661 = vadd.f32 %v650, %v660
  %v662 = vxor.u32 %v661, 2147483648
  %v663 = vmul.f32 %v662, 1.442695
  %v664 = vpow.pop %v663
  %v665 = vadd.f32 %v664, 1.0
  %v666 = vrcp.pop %v665
  %v667 = vmul.f32 1.0, %v666
  %668 = vst [vmem:[%s13] sm:$0x1] %v667
  // Predicated region
  $region54: #{ncf_mlp_forward.1} parent=0 // pred_check
    _
  $region55: #{ncf_mlp_forward.1} parent=0 // pred_check_branch
    %670 = sbr.rel (0) target = $region57
  $region56: #{ncf_mlp_forward.1} parent=0 // pred_region
    _
  $region57: #{ncf_mlp_forward.1} parent=0 // pred_fallthru
    _
  // Predicated region
  $region58: #{ncf_mlp_forward.1} parent=0 // pred_check
    _
  $region59: #{ncf_mlp_forward.1} parent=0 // pred_check_branch
    %672 = sbr.rel (0) target = $region61
  $region60: #{ncf_mlp_forward.1} parent=0 // pred_region
    _
  $region61: #{ncf_mlp_forward.1} parent=0 // pred_fallthru
    _

</llo_original>
